<compile_context>
chip_gen: v7x
topology: tpu7x:2x2x1
jax: 0.10.0
libtpu: 0.0.40
codegen_flags: <defaults>
</compile_context>

<pallas_src>
import jax
import jax.numpy as jnp
from jax.experimental import pallas as pl
from jax.experimental.pallas import tpu as pltpu

_LANE = 128


def _round_up(x, m):
    return ((x + m - 1) // m) * m


def _make_kernel(B, N, Bt, Ct, pad_rows, pad_cols):
    """Builds the per-block kernel with static shape/mask info baked in."""

    def kernel(s_ref, t_ref, out_ref):
        # s_ref / t_ref: (Bt, Ct) tiles of student / teacher distributions.
        # out_ref: (1, 1) SMEM partial sum owned exclusively by this grid step.
        s = s_ref[...].astype(jnp.float32)
        t = t_ref[...].astype(jnp.float32)
        if pad_rows or pad_cols:
            valid = None
            if pad_rows:
                row = (jax.lax.broadcasted_iota(jnp.int32, (Bt, Ct), 0)
                       + pl.program_id(0) * Bt)
                valid = row < B
            if pad_cols:
                col = (jax.lax.broadcasted_iota(jnp.int32, (Bt, Ct), 1)
                       + pl.program_id(1) * Ct)
                cmask = col < N
                valid = cmask if valid is None else (valid & cmask)
            # Mask BEFORE the log: padded lanes/rows see s=1 (log->0), t=0,
            # so they contribute exactly zero and never produce NaN.
            s = jnp.where(valid, s, 1.0)
            t = jnp.where(valid, t, 0.0)
        # EUP log + VPU mul in f32, single cross-lane reduce per block.
        out_ref[0, 0] = jnp.sum(t * jnp.log(s))

    return kernel


def criterion_for_distribution(preds_s, preds_t):
    """loss = -(1/B) * sum_{b,c} preds_t[b,c] * log(preds_s[b,c])."""
    assert preds_s.shape[0] == preds_t.shape[0], (
        'the batch size of student is not insistance with teacher')
    assert preds_s.ndim == 2 and preds_t.ndim == 2, (
        'expect (batch, classes) probability distributions')
    # TODO(synk): >2D preds would make the PyTorch reference return a tensor
    #             loss (not a scalar); only (batch, classes) inputs are handled.

    B, N = preds_s.shape
    itemsize = jnp.dtype(preds_s.dtype).itemsize
    # Sublane multiple of the dtype packing: f32 -> 8, bf16 -> 16, int8 -> 32.
    sublane = max(8, 32 // itemsize)

    # Class tile: multiple of 128 lanes, capped so VMEM stays bounded for any N.
    Ct = min(_round_up(N, _LANE), 2048)

    # ~16 MiB total for 2 inputs x 2 pipeline buffers (4 MiB per buffer max).
    vmem_budget = 16 * 1024 * 1024
    max_bt = max(sublane,
                 (vmem_budget // (4 * Ct * itemsize)) // sublane * sublane)
    Bt = min(max_bt, _round_up(B, sublane))
    nb = pl.cdiv(B, Bt)
    nc = pl.cdiv(N, Ct)

    # If a medium input collapsed to a single block, split the batch axis so
    # the grid has >=2 (up to 4) steps: enables megacore split + DMA overlap.
    block_bytes = Bt * Ct * itemsize
    if nb * nc < 2 and block_bytes >= (1 << 20):
        target = min(4, max(2, block_bytes // (512 * 1024)),
                     _round_up(B, sublane) // sublane)
        if target >= 2:
            Bt = _round_up(pl.cdiv(B, target), sublane)
            nb = pl.cdiv(B, Bt)

    pad_rows = (B % Bt) != 0
    pad_cols = (N % Ct) != 0

    kernel = _make_kernel(B, N, Bt, Ct, pad_rows, pad_cols)

    partials = pl.pallas_call(
        kernel,
        out_shape=jax.ShapeDtypeStruct((nb, nc), jnp.float32),
        grid_spec=pltpu.PrefetchScalarGridSpec(
            num_scalar_prefetch=0,
            grid=(nb, nc),
            in_specs=[pl.BlockSpec((Bt, Ct), lambda i, j: (i, j)),
                      pl.BlockSpec((Bt, Ct), lambda i, j: (i, j))],
            out_specs=pl.BlockSpec((1, 1), lambda i, j: (i, j),
                                   memory_space=pltpu.SMEM),
        ),
        compiler_params=pltpu.CompilerParams(
            dimension_semantics=("parallel", "parallel"),
            vmem_limit_bytes=32 * 1024 * 1024),
        cost_estimate=pl.CostEstimate(
            flops=2 * B * N,
            transcendentals=B * N,
            bytes_accessed=2 * B * N * itemsize + nb * nc * 4),
    )(preds_s, preds_t)

    # Final tiny reduction + (-1/B) scale, hoisted out of the kernel.
    return -(jnp.sum(partials) / jnp.float32(B))


def _criterion_ref(preds_s, preds_t):
    """Pure-JAX reference mirroring the PyTorch double loop."""
    s = preds_s.astype(jnp.float32)
    t = preds_t.astype(jnp.float32)
    return -(jnp.sum(t * jnp.log(s)) / jnp.float32(s.shape[0]))


if __name__ == "__main__":
    key = jax.random.PRNGKey(0)
    k1, k2, k3, k4, k5, k6 = jax.random.split(key, 6)

    # Small (batch, classes) probability distributions, as the module implies.
    B, N = 2, 4
    preds_s = jax.nn.softmax(jax.random.normal(k1, (B, N), jnp.float32), axis=-1)
    preds_t = jax.nn.softmax(jax.random.normal(k2, (B, N), jnp.float32), axis=-1)

    loss = jax.block_until_ready(criterion_for_distribution(preds_s, preds_t))
    ref = _criterion_ref(preds_s, preds_t)
    assert jnp.allclose(loss, ref, rtol=1e-4, atol=1e-5), (loss, ref)

    # Unaligned shapes + bf16 inputs (boundary masking, f32 accumulation).
    B2, N2 = 16, 21
    ps = jax.nn.softmax(jax.random.normal(k3, (B2, N2), jnp.float32),
                        axis=-1).astype(jnp.bfloat16)
    pt = jax.nn.softmax(jax.random.normal(k4, (B2, N2), jnp.float32),
                        axis=-1).astype(jnp.bfloat16)
    loss2 = jax.block_until_ready(criterion_for_distribution(ps, pt))
    ref2 = _criterion_ref(ps, pt)
    assert jnp.allclose(loss2, ref2, rtol=1e-3, atol=1e-3), (loss2, ref2)

    # Moderate shape exercising the 2-D grid (class-axis tiling + lane mask).
    B3, N3 = 512, 3000
    ps3 = jax.nn.softmax(jax.random.normal(k5, (B3, N3), jnp.float32), axis=-1)
    pt3 = jax.nn.softmax(jax.random.normal(k6, (B3, N3), jnp.float32), axis=-1)
    loss3 = jax.block_until_ready(criterion_for_distribution(ps3, pt3))
    ref3 = _criterion_ref(ps3, pt3)
    assert jnp.allclose(loss3, ref3, rtol=1e-4, atol=1e-4), (loss3, ref3)

    print("KERNEL_OK")
</pallas_src>

<mosaic_0001>
module attributes {stable_mosaic.version = 11 : i64} {
  func.func @kernel(%arg0: i32, %arg1: i32, %arg2: memref<8x128xf32, #tpu.memory_space<vmem>>, %arg3: memref<8x128xf32, #tpu.memory_space<vmem>>, %arg4: memref<1x1xf32, #tpu.memory_space<smem>>) attributes {dimension_semantics = [#tpu.dimension_semantics<parallel>, #tpu.dimension_semantics<parallel>], iteration_bounds = array<i64: 1, 1>, scalar_prefetch = 0 : i64, scratch_operands = 0 : i64, tpu.core_type = #tpu.core_type<tc>, window_params = [{transform_indices = @transform_0, window_bounds = array<i64: 8, 128>}, {transform_indices = @transform_1, window_bounds = array<i64: 8, 128>}, {transform_indices = @transform_2, window_bounds = array<i64: 1, 1>}]} {
    %c0 = arith.constant 0 : index
    %c0_0 = arith.constant 0 : index
    %0 = vector.load %arg2[%c0, %c0_0] : memref<8x128xf32, #tpu.memory_space<vmem>>, vector<8x128xf32>
    %c0_1 = arith.constant 0 : index
    %c0_2 = arith.constant 0 : index
    %1 = vector.load %arg3[%c0_1, %c0_2] : memref<8x128xf32, #tpu.memory_space<vmem>>, vector<8x128xf32>
    %2 = tpu.iota {dimensions = array<i32: 0>} : vector<8x128xi32>
    %c8_i32 = arith.constant 8 : i32
    %3 = arith.muli %arg0, %c8_i32 : i32
    %4 = vector.broadcast %3 : i32 to vector<8x128xi32>
    %5 = arith.addi %2, %4 : vector<8x128xi32>
    %c2_i32 = arith.constant 2 : i32
    %6 = vector.broadcast %c2_i32 : i32 to vector<8x128xi32>
    %7 = arith.cmpi slt, %5, %6 : vector<8x128xi32>
    %8 = tpu.iota {dimensions = array<i32: 1>} : vector<8x128xi32>
    %c128_i32 = arith.constant 128 : i32
    %9 = arith.muli %arg1, %c128_i32 : i32
    %10 = vector.broadcast %9 : i32 to vector<8x128xi32>
    %11 = arith.addi %8, %10 : vector<8x128xi32>
    %c4_i32 = arith.constant 4 : i32
    %12 = vector.broadcast %c4_i32 : i32 to vector<8x128xi32>
    %13 = arith.cmpi slt, %11, %12 : vector<8x128xi32>
    %14 = arith.andi %7, %13 : vector<8x128xi1>
    %cst = arith.constant 1.000000e+00 : f32
    %15 = vector.broadcast %cst : f32 to vector<8x128xf32>
    %16 = arith.select %14, %0, %15 : vector<8x128xi1>, vector<8x128xf32>
    %cst_3 = arith.constant 0.000000e+00 : f32
    %17 = vector.broadcast %cst_3 : f32 to vector<8x128xf32>
    %18 = arith.select %14, %1, %17 : vector<8x128xi1>, vector<8x128xf32>
    %19 = math.log %16 : vector<8x128xf32>
    %20 = arith.mulf %18, %19 : vector<8x128xf32>
    %21 = vector.shape_cast %20 : vector<8x128xf32> to vector<1x8x128xf32>
    %cst_4 = arith.constant dense<0.000000e+00> : vector<1xf32>
    %22 = vector.multi_reduction <add>, %21, %cst_4 [1, 2] : vector<1x8x128xf32> to vector<1xf32>
    %23 = vector.shape_cast %22 : vector<1xf32> to vector<1x1x1xf32>
    %24 = vector.extract %23[0, 0, 0] : f32 from vector<1x1x1xf32>
    %c0_5 = arith.constant 0 : index
    %c0_6 = arith.constant 0 : index
    %25 = memref.load %arg4[%c0_5, %c0_6] : memref<1x1xf32, #tpu.memory_space<smem>>
    memref.store %24, %arg4[%c0_5, %c0_6] : memref<1x1xf32, #tpu.memory_space<smem>>
    return
  }
  func.func @transform_0(%arg0: i32, %arg1: i32) -> (i32, i32) {
    %c0_i32 = arith.constant 0 : i32
    return %arg0, %arg1 : i32, i32
  }
  func.func @transform_1(%arg0: i32, %arg1: i32) -> (i32, i32) {
    %c0_i32 = arith.constant 0 : i32
    return %arg0, %arg1 : i32, i32
  }
  func.func @transform_2(%arg0: i32, %arg1: i32) -> (i32, i32) {
    %c0_i32 = arith.constant 0 : i32
    return %arg0, %arg1 : i32, i32
  }
}

</mosaic_0001>

<llo_original>
// kernel: tpu_custom_call.1
$region0: #{tpu_custom_call.1}
  #allocation0 [shape = 'u32[]', space=smem, size = 0x4, offset = 0x4, fixed_abs, tag = 'smem constant byte address 0x4 - core index']
  #allocation1 [shape = 'u32[144,128]{1,0:T(1,128)}', space=vmem, size = 0x12000, scoped, tag = 'internal scratch']
  %s0 = inlined_call_operand.hbm [shape: f32[2,4], index: 0, kind: input, shape index: {}]
  %s1 = inlined_call_operand.vmem [shape: f32[2,4], index: 1, kind: input, shape index: {}]
  %s2 = inlined_call_operand.hbm [shape: f32[1,1], index: 2, kind: output, shape index: {}]
  %s3 = sld [smem:[#allocation0]]
  $region22: #{tpu_custom_call.1} parent=0
    _
  %s5 = ssub.s32 1, %s3
  %s6 = scalar_select 0, %s5, %s3
  $region1: #{tpu_custom_call.1} parent=0
    #allocation2 [shape = 'u8[4096]{0}', space=vmem, size = 0x1000, scoped, tag = 'input window, operand 0, single buffered']
    #allocation3 [shape = 's32[1]{0}', space=sflag, size = 0x4, scoped, tag = 'scoped memory for tpu_custom_call.1']
    #allocation4 [shape = 's32[1]{0}', space=sflag, size = 0x4, scoped, tag = 'scoped memory for tpu_custom_call.1']
    #allocation5 [shape = 'u8[512]{0}', space=smem, size = 0x200, scoped, tag = 'output window, operand 0, single buffered']
    %7 = vsyncpa [#allocation3], 0
    %8 = vsyncpa [#allocation4], 0
    // Predicated region
    $region2: #{tpu_custom_call.1} parent=1 // pred_check
      _
    $region3: #{tpu_custom_call.1} parent=1 // pred_check_branch
      %10 = sbr.rel (0) target = $region5
    $region4: #{tpu_custom_call.1} parent=1 // pred_region
      %s12 = ssub.s32 128, 32
      %13 = vsyncadd [#allocation3], %s12
      %s14 = sshll.u32 [#allocation2], 4
      %s15 = int_to_ptr.vmem [resolvable:$true] %s14
      %20 = dma.hbm_to_vmem [thread:$0]  %s0, 32, %s15, [#allocation3], 32, 32, 2
    $region5: #{tpu_custom_call.1} parent=1 // pred_fallthru
      _
    // Predicated region
    $region6: #{tpu_custom_call.1} parent=1 // pred_check
      _
    $region7: #{tpu_custom_call.1} parent=1 // pred_check_branch
      %22 = sbr.rel (0) target = $region9
    $region8: #{tpu_custom_call.1} parent=1 // pred_region
      _
    $region9: #{tpu_custom_call.1} parent=1 // pred_fallthru
      _
    // Predicated region
    $region10: #{tpu_custom_call.1} parent=1 // pred_check
      _
    $region11: #{tpu_custom_call.1} parent=1 // pred_check_branch
      %24 = sbr.rel (0) target = $region13
    $region12: #{tpu_custom_call.1} parent=1 // pred_region
      %25 = dma.done [#allocation3], 128
    $region13: #{tpu_custom_call.1} parent=1 // pred_fallthru
      _
    %v26 = vld [vmem:[#allocation2] sm:$0xff]
    %v27 = vld [vmem:[%s1] sm:$0xff]
    %v28 = vlaneseq
    %v29 = vshrl.u32 %v28, 7
    %s30 = smul.u32 0, 8
    %v31 = vstv %s30
    %v32 = vadd.s32 %v29, %v31
    %vm33 = vcmp.lt.s32.totalorder %v32, 2
    %v34 = vlaneseq
    %v35 = vand.u32 %v34, 127
    %s36 = smul.u32 0, 128
    %v37 = vstv %s36
    %v38 = vadd.s32 %v35, %v37
    %vm39 = vcmp.lt.s32.totalorder %v38, 4
    %vm40 = vmand %vm33, %vm39
    %v41 = vsel %vm40, %v26, 1.0
    %v42 = vsel %vm40, %v27, 0.0
    %v43 = vlog2.pop %v41
    %v44 = vmul.f32 %v43, 0.6931472
    %v45 = vmul.f32 %v42, %v44
    %46 = vadd.xlane.f32.xlu0 %v45
    %v47 = vpop.xlane.xlu0 %46
    %v48 = vrot.slane %v47, 4
    %v49 = vadd.f32 %v47, %v48
    %v50 = vrot.slane %v49, 2
    %v51 = vadd.f32 %v49, %v50
    %v52 = vrot.slane %v51, 1
    %v53 = vadd.f32 %v51, %v52
    %s54 = vtos %v53
    %s55 = scalar_lea.smem [#allocation5], 0
    %56 = sst [smem:[%s55]] %s54
    // Predicated region
    $region14: #{tpu_custom_call.1} parent=1 // pred_check
      _
    $region15: #{tpu_custom_call.1} parent=1 // pred_check_branch
      %58 = sbr.rel (0) target = $region17
    $region16: #{tpu_custom_call.1} parent=1 // pred_region
      %s60 = ssub.s32 16, 16
      %61 = vsyncadd [#allocation4], %s60
      %64 = dma.smem_to_hbm [#allocation5], 16, %s2, [#allocation4]
    $region17: #{tpu_custom_call.1} parent=1 // pred_fallthru
      _
    // Predicated region
    $region18: #{tpu_custom_call.1} parent=1 // pred_check
      _
    $region19: #{tpu_custom_call.1} parent=1 // pred_check_branch
      %66 = sbr.rel (0) target = $region21
    $region20: #{tpu_custom_call.1} parent=1 // pred_region
      %67 = dma.done [#allocation4], 16
    $region21: #{tpu_custom_call.1} parent=1 // pred_fallthru
      _
    %68 = sfence
    %69 = vsyncpa [#allocation3], 1
    %70 = vsyncpa [#allocation4], 1

</llo_original>
